<compile_context>
chip_gen: v5e
topology: v5e:2x2
jax: 0.10.0
libtpu: 0.0.40
codegen_flags: <defaults>
</compile_context>

<pallas_src>
import functools
from math import sqrt

import jax
import jax.numpy as jnp
from jax.experimental import pallas as pl
from jax.experimental.pallas import tpu as pltpu

WINDOW_SIZE = 30
INPUT_SIZE = 6 * WINDOW_SIZE   # 180
HIDDEN_SIZE = 64
OUTPUT_SIZE = 10               # forecast_steps


# ----------------------------------------------------------------------------
# Kernel
# ----------------------------------------------------------------------------
def pinn_kernel(x_ref, w1_ref, w23_ref, w4_ref, b123_ref, b4_ref, o_ref, *,
                act_dtype):
    """One batch tile: 180 -> 64 -> 64 -> 64 -> O_pad, all in VMEM."""
    f32 = jnp.float32
    cd = w1_ref.dtype                       # MXU operand dtype (bf16 normally)
    b123 = b123_ref[...].astype(f32)        # (3, H) resident biases

    def layer(h, w, b):
        acc = jnp.dot(h, w, preferred_element_type=f32)       # MXU, f32 acc
        act = jnp.tanh((acc + b).astype(act_dtype))            # EUP
        return act.astype(cd)

    h = layer(x_ref[...], w1_ref[...], b123[0:1, :])
    h = layer(h, w23_ref[0], b123[1:2, :])
    h = layer(h, w23_ref[1], b123[2:3, :])

    y = jnp.dot(h, w4_ref[...], preferred_element_type=f32)
    y = y + b4_ref[...].astype(f32)
    o_ref[...] = y.astype(o_ref.dtype)


# ----------------------------------------------------------------------------
# Chip-aware tiling helpers (perf only; never affect correctness)
# ----------------------------------------------------------------------------
def _device_kind():
    try:
        return jax.devices()[0].device_kind.lower()
    except Exception:
        return ""


def _num_tensorcores_per_chip():
    kind = _device_kind()
    # v7x exposes two TensorCores per chip; v5e/v6e have one.
    return 2 if ("v7" in kind or "tpu7" in kind or "7x" in kind) else 1


def _default_act_dtype():
    # v5-generation VPU/EUP has no bf16 path: keep activations in f32 there.
    return jnp.float32 if "v5" in _device_kind() else jnp.bfloat16


def _pick_block_b(batch, num_cores=1, max_block=1024):
    """Batch tile: multiple of 8 (sublane), divides B, as large as possible
    (fewest grid steps, amortising the ~0.35us per-step overhead). On
    multi-TensorCore chips the step count is kept a multiple of num_cores so
    the parallel grid stays balanced across cores."""
    if batch % 8 != 0:
        return batch                       # small / ragged batch: single tile
    if num_cores <= 1:
        cand = min(batch, max_block)       # single TC: fewest, fattest steps
    else:
        if batch % (8 * num_cores) != 0:
            return batch                   # cannot split evenly: single tile
        cand = min(batch // num_cores, max_block)
    cand -= cand % 8
    while batch % cand != 0 or (num_cores > 1
                                and (batch // cand) % num_cores != 0):
        cand -= 8
    return cand


# ----------------------------------------------------------------------------
# Wrapper
# ----------------------------------------------------------------------------
@functools.partial(jax.jit, static_argnames=("block_b", "act_dtype"))
def pinn_forward(x, params, *, block_b=None, act_dtype=None):
    w1, b1, w2, b2, w3, b3, w4, b4 = params
    B, F = x.shape
    H = w1.shape[1]
    O = w4.shape[1]
    cd = w1.dtype

    if act_dtype is None:
        act_dtype = _default_act_dtype()
    if block_b is None:
        block_b = _pick_block_b(B, _num_tensorcores_per_chip())
    assert B % block_b == 0, "batch must be a multiple of block_b"

    # Cast x to the MXU operand dtype before the kernel (halves x DMA if f32).
    x = x.astype(cd)

    # Pack invariant operands: fewer inputs -> less per-step bookkeeping.
    w23 = jnp.stack([w2, w3])                        # (2, H, H)
    b123 = jnp.concatenate([b1, b2, b3], axis=0)     # (3, H)

    # Lane-dense output: pad O to a multiple of 128 lanes (zeros contribute 0).
    o_pad = max(128, ((O + 127) // 128) * 128)
    w4p = jnp.pad(w4, ((0, 0), (0, o_pad - O)))
    b4p = jnp.pad(b4, ((0, 0), (0, o_pad - O)))

    grid = (B // block_b,)
    batch_map = lambda i: (i, 0)

    flops = 2 * B * (F * H + 2 * H * H + H * O)
    transcendentals = 3 * B * H
    bytes_accessed = (x.size * x.dtype.itemsize
                      + w1.size * w1.dtype.itemsize
                      + w23.size * w23.dtype.itemsize
                      + w4p.size * w4p.dtype.itemsize
                      + b123.size * b123.dtype.itemsize
                      + b4p.size * b4p.dtype.itemsize
                      + B * o_pad * 4)

    out = pl.pallas_call(
        functools.partial(pinn_kernel, act_dtype=act_dtype),
        out_shape=jax.ShapeDtypeStruct((B, o_pad), jnp.float32),
        grid_spec=pl.GridSpec(
            grid=grid,
            in_specs=[
                pl.BlockSpec((block_b, F), batch_map),          # x tile
                pl.BlockSpec((F, H), lambda i: (0, 0)),         # w1 (resident)
                pl.BlockSpec((2, H, H), lambda i: (0, 0, 0)),   # w2, w3
                pl.BlockSpec((H, o_pad), lambda i: (0, 0)),     # w4 (padded)
                pl.BlockSpec((3, H), lambda i: (0, 0)),         # b1, b2, b3
                pl.BlockSpec((1, o_pad), lambda i: (0, 0)),     # b4 (padded)
            ],
            out_specs=pl.BlockSpec((block_b, o_pad), batch_map),
        ),
        compiler_params=pltpu.CompilerParams(
            dimension_semantics=("parallel",)),
        cost_estimate=pl.CostEstimate(
            flops=flops, transcendentals=transcendentals,
            bytes_accessed=bytes_accessed),
    )(x, w1, w23, w4p, b123, b4p)

    return out[:, :O]


# ----------------------------------------------------------------------------
# Params + pure-JAX reference
# ----------------------------------------------------------------------------
def init_params(key, input_size=INPUT_SIZE, hidden_size=HIDDEN_SIZE,
                output_size=OUTPUT_SIZE, dtype=jnp.bfloat16):
    """Deterministic init mimicking PyTorch nn.Linear default:
    U(-1/sqrt(fan_in), 1/sqrt(fan_in)) for weights and biases.
    Weights stored as [in, out] (transpose of PyTorch's [out, in])."""
    dims = [(input_size, hidden_size),
            (hidden_size, hidden_size),
            (hidden_size, hidden_size),
            (hidden_size, output_size)]
    params = []
    for fan_in, fan_out in dims:
        key, kw, kb = jax.random.split(key, 3)
        bound = 1.0 / sqrt(fan_in)
        w = jax.random.uniform(kw, (fan_in, fan_out), jnp.float32,
                               minval=-bound, maxval=bound).astype(dtype)
        b = jax.random.uniform(kb, (1, fan_out), jnp.float32,
                               minval=-bound, maxval=bound).astype(dtype)
        params += [w, b]
    return tuple(params)


def pinn_reference(x, params, act_dtype=jnp.bfloat16):
    """Pure-JAX reference matching the kernel's mixed-precision arithmetic."""
    w1, b1, w2, b2, w3, b3, w4, b4 = params
    cd = w1.dtype
    f32 = jnp.float32
    h = x.astype(cd)
    for w, b in ((w1, b1), (w2, b2), (w3, b3)):
        acc = jnp.dot(h, w, preferred_element_type=f32) + b.astype(f32)
        h = jnp.tanh(acc.astype(act_dtype)).astype(cd)
    return jnp.dot(h, w4, preferred_element_type=f32) + b4.astype(f32)


# ----------------------------------------------------------------------------
if __name__ == "__main__":
    key = jax.random.PRNGKey(0)
    kp, kx = jax.random.split(key)

    params = init_params(kp, dtype=jnp.bfloat16)
    batch = 128
    x = jax.random.normal(kx, (batch, INPUT_SIZE), jnp.float32)

    act_dtype = _default_act_dtype()

    # block_b auto-picked: single fat tile on v5e/v6e, 2 balanced tiles on v7x.
    y = pinn_forward(x, params, act_dtype=act_dtype)
    y = jax.block_until_ready(y)

    y_ref = pinn_reference(x, params, act_dtype=act_dtype)
    assert y.shape == (batch, OUTPUT_SIZE)
    assert y.dtype == jnp.float32
    max_err = float(jnp.max(jnp.abs(y - y_ref)))
    assert jnp.allclose(y, y_ref, atol=1e-2, rtol=1e-2), \
        f"mismatch vs reference (max abs err {max_err})"

    print("KERNEL_OK")
</pallas_src>

<mosaic_0001>
module attributes {stable_mosaic.version = 11 : i64} {
  func.func @pinn_kernel(%arg0: i32, %arg1: memref<128x180xbf16, #tpu.memory_space<vmem>>, %arg2: memref<180x64xbf16, #tpu.memory_space<vmem>>, %arg3: memref<2x64x64xbf16, #tpu.memory_space<vmem>>, %arg4: memref<64x128xbf16, #tpu.memory_space<vmem>>, %arg5: memref<3x64xbf16, #tpu.memory_space<vmem>>, %arg6: memref<1x128xbf16, #tpu.memory_space<vmem>>, %arg7: memref<128x128xf32, #tpu.memory_space<vmem>>) attributes {dimension_semantics = [#tpu.dimension_semantics<parallel>], iteration_bounds = array<i64: 1>, scalar_prefetch = 0 : i64, scratch_operands = 0 : i64, tpu.core_type = #tpu.core_type<tc>, window_params = [{transform_indices = @transform_0, window_bounds = array<i64: 128, 180>}, {pipeline_mode = #tpu.pipeline_mode<synchronous>, transform_indices = @transform_1, window_bounds = array<i64: 180, 64>}, {pipeline_mode = #tpu.pipeline_mode<synchronous>, transform_indices = @transform_2, window_bounds = array<i64: 2, 64, 64>}, {pipeline_mode = #tpu.pipeline_mode<synchronous>, transform_indices = @transform_3, window_bounds = array<i64: 64, 128>}, {pipeline_mode = #tpu.pipeline_mode<synchronous>, transform_indices = @transform_4, window_bounds = array<i64: 3, 64>}, {pipeline_mode = #tpu.pipeline_mode<synchronous>, transform_indices = @transform_5, window_bounds = array<i64: 1, 128>}, {transform_indices = @transform_6, window_bounds = array<i64: 128, 128>}]} {
    %c0 = arith.constant 0 : index
    %c0_0 = arith.constant 0 : index
    %0 = vector.load %arg5[%c0, %c0_0] : memref<3x64xbf16, #tpu.memory_space<vmem>>, vector<3x64xbf16>
    %1 = arith.extf %0 : vector<3x64xbf16> to vector<3x64xf32>
    %c0_1 = arith.constant 0 : index
    %c0_2 = arith.constant 0 : index
    %2 = vector.load %arg1[%c0_1, %c0_2] : memref<128x180xbf16, #tpu.memory_space<vmem>>, vector<128x180xbf16>
    %c0_3 = arith.constant 0 : index
    %c0_4 = arith.constant 0 : index
    %3 = vector.load %arg2[%c0_3, %c0_4] : memref<180x64xbf16, #tpu.memory_space<vmem>>, vector<180x64xbf16>
    %4 = vector.extract_strided_slice %1 {offsets = [0, 0], sizes = [1, 64], strides = [1, 1]} : vector<3x64xf32> to vector<1x64xf32>
    %cst = arith.constant dense<0.000000e+00> : vector<128x64xf32>
    %5 = tpu.matmul %2, %3, %cst {dimension_numbers = #tpu.dot_dimension_numbers<[1], [0], [0], [1], [0, 0, 1, 1], [], []>} : vector<128x180xbf16>, vector<180x64xbf16>, vector<128x64xf32> -> vector<128x64xf32>
    %6 = vector.broadcast %4 : vector<1x64xf32> to vector<128x64xf32>
    %7 = arith.addf %5, %6 : vector<128x64xf32>
    %8 = arith.truncf %7 : vector<128x64xf32> to vector<128x64xbf16>
    %9 = math.tanh %8 : vector<128x64xbf16>
    %c0_5 = arith.constant 0 : index
    %c0_6 = arith.constant 0 : index
    %c0_7 = arith.constant 0 : index
    %10 = vector.load %arg3[%c0_5, %c0_6, %c0_7] : memref<2x64x64xbf16, #tpu.memory_space<vmem>>, vector<1x64x64xbf16>
    %11 = vector.shape_cast %10 : vector<1x64x64xbf16> to vector<64x64xbf16>
    %12 = vector.extract_strided_slice %1 {offsets = [1, 0], sizes = [1, 64], strides = [1, 1]} : vector<3x64xf32> to vector<1x64xf32>
    %cst_8 = arith.constant dense<0.000000e+00> : vector<128x64xf32>
    %13 = tpu.matmul %9, %11, %cst_8 {dimension_numbers = #tpu.dot_dimension_numbers<[1], [0], [0], [1], [0, 0, 1, 1], [], []>} : vector<128x64xbf16>, vector<64x64xbf16>, vector<128x64xf32> -> vector<128x64xf32>
    %14 = vector.broadcast %12 : vector<1x64xf32> to vector<128x64xf32>
    %15 = arith.addf %13, %14 : vector<128x64xf32>
    %16 = arith.truncf %15 : vector<128x64xf32> to vector<128x64xbf16>
    %17 = math.tanh %16 : vector<128x64xbf16>
    %c1 = arith.constant 1 : index
    %c0_9 = arith.constant 0 : index
    %c0_10 = arith.constant 0 : index
    %18 = vector.load %arg3[%c1, %c0_9, %c0_10] : memref<2x64x64xbf16, #tpu.memory_space<vmem>>, vector<1x64x64xbf16>
    %19 = vector.shape_cast %18 : vector<1x64x64xbf16> to vector<64x64xbf16>
    %20 = vector.extract_strided_slice %1 {offsets = [2, 0], sizes = [1, 64], strides = [1, 1]} : vector<3x64xf32> to vector<1x64xf32>
    %cst_11 = arith.constant dense<0.000000e+00> : vector<128x64xf32>
    %21 = tpu.matmul %17, %19, %cst_11 {dimension_numbers = #tpu.dot_dimension_numbers<[1], [0], [0], [1], [0, 0, 1, 1], [], []>} : vector<128x64xbf16>, vector<64x64xbf16>, vector<128x64xf32> -> vector<128x64xf32>
    %22 = vector.broadcast %20 : vector<1x64xf32> to vector<128x64xf32>
    %23 = arith.addf %21, %22 : vector<128x64xf32>
    %24 = arith.truncf %23 : vector<128x64xf32> to vector<128x64xbf16>
    %25 = math.tanh %24 : vector<128x64xbf16>
    %c0_12 = arith.constant 0 : index
    %c0_13 = arith.constant 0 : index
    %26 = vector.load %arg4[%c0_12, %c0_13] : memref<64x128xbf16, #tpu.memory_space<vmem>>, vector<64x128xbf16>
    %cst_14 = arith.constant dense<0.000000e+00> : vector<128x128xf32>
    %27 = tpu.matmul %25, %26, %cst_14 {dimension_numbers = #tpu.dot_dimension_numbers<[1], [0], [0], [1], [0, 0, 1, 1], [], []>} : vector<128x64xbf16>, vector<64x128xbf16>, vector<128x128xf32> -> vector<128x128xf32>
    %c0_15 = arith.constant 0 : index
    %c0_16 = arith.constant 0 : index
    %28 = vector.load %arg6[%c0_15, %c0_16] : memref<1x128xbf16, #tpu.memory_space<vmem>>, vector<1x128xbf16>
    %29 = arith.extf %28 : vector<1x128xbf16> to vector<1x128xf32>
    %30 = vector.broadcast %29 : vector<1x128xf32> to vector<128x128xf32>
    %31 = arith.addf %27, %30 : vector<128x128xf32>
    %c0_17 = arith.constant 0 : index
    %c0_18 = arith.constant 0 : index
    %32 = vector.load %arg7[%c0_17, %c0_18] : memref<128x128xf32, #tpu.memory_space<vmem>>, vector<128x128xf32>
    tpu.vector_store %arg7[%c0_17, %c0_18], %31 {strides = array<i32>} : memref<128x128xf32, #tpu.memory_space<vmem>>, vector<128x128xf32>,
    return
  }
  func.func @transform_0(%arg0: i32) -> (i32, i32) {
    %c0_i32 = arith.constant 0 : i32
    %c0_i32_0 = arith.constant 0 : i32
    return %arg0, %c0_i32 : i32, i32
  }
  func.func @transform_1(%arg0: i32) -> (i32, i32) {
    %c0_i32 = arith.constant 0 : i32
    %c0_i32_0 = arith.constant 0 : i32
    %c0_i32_1 = arith.constant 0 : i32
    return %c0_i32, %c0_i32_0 : i32, i32
  }
  func.func @transform_2(%arg0: i32) -> (i32, i32, i32) {
    %c0_i32 = arith.constant 0 : i32
    %c0_i32_0 = arith.constant 0 : i32
    %c0_i32_1 = arith.constant 0 : i32
    %c0_i32_2 = arith.constant 0 : i32
    return %c0_i32, %c0_i32_0, %c0_i32_1 : i32, i32, i32
  }
  func.func @transform_3(%arg0: i32) -> (i32, i32) {
    %c0_i32 = arith.constant 0 : i32
    %c0_i32_0 = arith.constant 0 : i32
    %c0_i32_1 = arith.constant 0 : i32
    return %c0_i32, %c0_i32_0 : i32, i32
  }
  func.func @transform_4(%arg0: i32) -> (i32, i32) {
    %c0_i32 = arith.constant 0 : i32
    %c0_i32_0 = arith.constant 0 : i32
    %c0_i32_1 = arith.constant 0 : i32
    return %c0_i32, %c0_i32_0 : i32, i32
  }
  func.func @transform_5(%arg0: i32) -> (i32, i32) {
    %c0_i32 = arith.constant 0 : i32
    %c0_i32_0 = arith.constant 0 : i32
    %c0_i32_1 = arith.constant 0 : i32
    return %c0_i32, %c0_i32_0 : i32, i32
  }
  func.func @transform_6(%arg0: i32) -> (i32, i32) {
    %c0_i32 = arith.constant 0 : i32
    %c0_i32_0 = arith.constant 0 : i32
    return %arg0, %c0_i32 : i32, i32
  }
}

</mosaic_0001>

<llo_original>
// kernel: pinn_forward.1
$region0: #{pinn_forward.1}
  #allocation0 [shape = 'u32[]', space=smem, size = 0x4, offset = 0x4, fixed_abs, tag = 'smem constant byte address 0x4 - core index']
  #allocation1 [shape = 'u32[72,128]{1,0:T(1,128)}', space=vmem, size = 0x9000, scoped, tag = 'internal scratch']
  %s0 = inlined_call_operand.vmem [shape: bf16[128,180], index: 0, kind: input, shape index: {}]
  %s1 = inlined_call_operand.vmem [shape: bf16[180,64], index: 1, kind: input, shape index: {}]
  %s2 = inlined_call_operand.vmem [shape: bf16[2,64,64], index: 2, kind: input, shape index: {}]
  %s3 = inlined_call_operand.vmem [shape: bf16[64,128], index: 3, kind: input, shape index: {}]
  %s4 = inlined_call_operand.vmem [shape: bf16[3,64], index: 4, kind: input, shape index: {}]
  %s5 = inlined_call_operand.vmem [shape: bf16[1,128], index: 5, kind: input, shape index: {}]
  %s6 = inlined_call_operand.vmem [shape: f32[128,128], index: 6, kind: output, shape index: {}]
  %s7 = sld [smem:[#allocation0]]
  $region34: #{pinn_forward.1} parent=0
    _
  %s9 = ssub.s32 1, %s7
  %s10 = scalar_select 0, %s9, %s7
  // Predicated region
  $region2: #{pinn_forward.1} parent=0 // pred_check
    _
  $region3: #{pinn_forward.1} parent=0 // pred_check_branch
    %12 = sbr.rel (0) target = $region5
  $region4: #{pinn_forward.1} parent=0 // pred_region
    _
  $region5: #{pinn_forward.1} parent=0 // pred_fallthru
    _
  // Predicated region
  $region6: #{pinn_forward.1} parent=0 // pred_check
    _
  $region7: #{pinn_forward.1} parent=0 // pred_check_branch
    %14 = sbr.rel (0) target = $region9
  $region8: #{pinn_forward.1} parent=0 // pred_region
    _
  $region9: #{pinn_forward.1} parent=0 // pred_fallthru
    _
  // Predicated region
  $region10: #{pinn_forward.1} parent=0 // pred_check
    _
  $region11: #{pinn_forward.1} parent=0 // pred_check_branch
    %16 = sbr.rel (0) target = $region13
  $region12: #{pinn_forward.1} parent=0 // pred_region
    _
  $region13: #{pinn_forward.1} parent=0 // pred_fallthru
    _
  // Predicated region
  $region14: #{pinn_forward.1} parent=0 // pred_check
    _
  $region15: #{pinn_forward.1} parent=0 // pred_check_branch
    %18 = sbr.rel (0) target = $region17
  $region16: #{pinn_forward.1} parent=0 // pred_region
    _
  $region17: #{pinn_forward.1} parent=0 // pred_fallthru
    _
  // Predicated region
  $region18: #{pinn_forward.1} parent=0 // pred_check
    _
  $region19: #{pinn_forward.1} parent=0 // pred_check_branch
    %20 = sbr.rel (0) target = $region21
  $region20: #{pinn_forward.1} parent=0 // pred_region
    _
  $region21: #{pinn_forward.1} parent=0 // pred_fallthru
    _
  // Predicated region
  $region22: #{pinn_forward.1} parent=0 // pred_check
    _
  $region23: #{pinn_forward.1} parent=0 // pred_check_branch
    %22 = sbr.rel (0) target = $region25
  $region24: #{pinn_forward.1} parent=0 // pred_region
    _
  $region25: #{pinn_forward.1} parent=0 // pred_fallthru
    _
  %v24 = vld [vmem:[%s4] sm:$0x3]
  %v25 = vunpack.c.l.bf16 %v24
  %v26 = vld [vmem:[%s0] sm:$0xff]
  %v27 = vld [vmem:[%s0 + $0x8] sm:$0xff]
  %v28 = vld [vmem:[%s0 + $0x10] sm:$0xff]
  %v29 = vld [vmem:[%s0 + $0x18] sm:$0xff]
  %v30 = vld [vmem:[%s0 + $0x20] sm:$0xff]
  %v31 = vld [vmem:[%s0 + $0x28] sm:$0xff]
  %v32 = vld [vmem:[%s0 + $0x30] sm:$0xff]
  %v33 = vld [vmem:[%s0 + $0x38] sm:$0xff]
  %v34 = vld [vmem:[%s0 + $0x40] sm:$0xff]
  %v35 = vld [vmem:[%s0 + $0x48] sm:$0xff]
  %v36 = vld [vmem:[%s0 + $0x50] sm:$0xff]
  %v37 = vld [vmem:[%s0 + $0x58] sm:$0xff]
  %v38 = vld [vmem:[%s0 + $0x60] sm:$0xff]
  %v39 = vld [vmem:[%s0 + $0x68] sm:$0xff]
  %v40 = vld [vmem:[%s0 + $0x70] sm:$0xff]
  %v41 = vld [vmem:[%s0 + $0x78] sm:$0xff]
  %v42 = vld [vmem:[%s1] sm:$0xf]
  %v43 = vld [vmem:[%s1 + $0x4] sm:$0xf]
  %v44 = vld [vmem:[%s1 + $0x8] sm:$0xf]
  %v45 = vld [vmem:[%s1 + $0xc] sm:$0xf]
  %v46 = vld [vmem:[%s1 + $0x10] sm:$0xf]
  %v47 = vld [vmem:[%s1 + $0x14] sm:$0xf]
  %v48 = vld [vmem:[%s1 + $0x18] sm:$0xf]
  %v49 = vld [vmem:[%s1 + $0x1c] sm:$0xf]
  %v50 = vld [vmem:[%s1 + $0x20] sm:$0xf]
  %v51 = vld [vmem:[%s1 + $0x24] sm:$0xf]
  %v52 = vld [vmem:[%s1 + $0x28] sm:$0xf]
  %v53 = vld [vmem:[%s1 + $0x2c] sm:$0xf]
  %v54 = vld [vmem:[%s1 + $0x30] sm:$0xf]
  %v55 = vld [vmem:[%s1 + $0x34] sm:$0xf]
  %v56 = vld [vmem:[%s1 + $0x38] sm:$0xf]
  %v57 = vld [vmem:[%s1 + $0x3c] sm:$0xf]
  %v58 = vld [vmem:[%s1 + $0x40] sm:$0xf]
  %v59 = vld [vmem:[%s1 + $0x44] sm:$0xf]
  %v60 = vld [vmem:[%s1 + $0x48] sm:$0xf]
  %v61 = vld [vmem:[%s1 + $0x4c] sm:$0xf]
  %v62 = vld [vmem:[%s1 + $0x50] sm:$0xf]
  %v63 = vld [vmem:[%s1 + $0x54] sm:$0xf]
  %v64 = vld [vmem:[%s1 + $0x58] sm:$0x3]
  %v65 = vperm.slane %v25, 0
  %v82 = vunpack.c.l.b16 %v26
  %v83 = vunpack.c.h.b16 %v26
  %v84 = vunpack.c.l.b16 %v27
  %v85 = vunpack.c.h.b16 %v27
  %v86 = vunpack.c.l.b16 %v28
  %v87 = vunpack.c.h.b16 %v28
  %v88 = vunpack.c.l.b16 %v29
  %v89 = vunpack.c.h.b16 %v29
  %v90 = vunpack.c.l.b16 %v30
  %v91 = vunpack.c.h.b16 %v30
  %v92 = vunpack.c.l.b16 %v31
  %v93 = vunpack.c.h.b16 %v31
  %v94 = vunpack.c.l.b16 %v32
  %v95 = vunpack.c.h.b16 %v32
  %v96 = vunpack.c.l.b16 %v33
  %v97 = vunpack.c.h.b16 %v33
  %v98 = vunpack.c.l.b16 %v34
  %v99 = vunpack.c.h.b16 %v34
  %v100 = vunpack.c.l.b16 %v35
  %v101 = vunpack.c.h.b16 %v35
  %v102 = vunpack.c.l.b16 %v36
  %v103 = vunpack.c.h.b16 %v36
  %v104 = vunpack.c.l.b16 %v37
  %v105 = vunpack.c.h.b16 %v37
  %v106 = vunpack.c.l.b16 %v38
  %v107 = vunpack.c.h.b16 %v38
  %v108 = vunpack.c.l.b16 %v39
  %v109 = vunpack.c.h.b16 %v39
  %v110 = vunpack.c.l.b16 %v40
  %v111 = vunpack.c.h.b16 %v40
  %v112 = vunpack.c.l.b16 %v41
  %v113 = vunpack.c.h.b16 %v41
  %v114 = vpack.c.b16 %v84, %v82
  %v115 = vpack.c.b16 %v85, %v83
  %v116 = vpack.c.b16 %v88, %v86
  %v117 = vpack.c.b16 %v89, %v87
  %v118 = vpack.c.b16 %v92, %v90
  %v119 = vpack.c.b16 %v93, %v91
  %v120 = vpack.c.b16 %v96, %v94
  %v121 = vpack.c.b16 %v97, %v95
  %v122 = vpack.c.b16 %v100, %v98
  %v123 = vpack.c.b16 %v101, %v99
  %v124 = vpack.c.b16 %v104, %v102
  %v125 = vpack.c.b16 %v105, %v103
  %v126 = vpack.c.b16 %v108, %v106
  %v127 = vpack.c.b16 %v109, %v107
  %v128 = vpack.c.b16 %v112, %v110
  %v129 = vpack.c.b16 %v113, %v111
  %v161 = vunpack.c.l.b16 %v42
  %v162 = vunpack.c.l.b16 %v43
  %v163 = vunpack.c.l.b16 %v44
  %v164 = vunpack.c.l.b16 %v45
  %v165 = vunpack.c.l.b16 %v46
  %v166 = vunpack.c.l.b16 %v47
  %v167 = vunpack.c.l.b16 %v48
  %v168 = vunpack.c.l.b16 %v49
  %v169 = vunpack.c.l.b16 %v50
  %v170 = vunpack.c.l.b16 %v51
  %v171 = vunpack.c.l.b16 %v52
  %v172 = vunpack.c.l.b16 %v53
  %v173 = vunpack.c.l.b16 %v54
  %v174 = vunpack.c.l.b16 %v55
  %v175 = vunpack.c.l.b16 %v56
  %v176 = vunpack.c.l.b16 %v57
  %v177 = vunpack.c.l.b16 %v58
  %v178 = vunpack.c.l.b16 %v59
  %v179 = vunpack.c.l.b16 %v60
  %v180 = vunpack.c.l.b16 %v61
  %v181 = vunpack.c.l.b16 %v62
  %v182 = vunpack.c.l.b16 %v63
  %v183 = vunpack.c.l.b16 %v64
  %v184 = vpack.c.b16 %v162, %v161
  %v185 = vpack.c.b16 %v164, %v163
  %v186 = vpack.c.b16 %v166, %v165
  %v187 = vpack.c.b16 %v168, %v167
  %v188 = vpack.c.b16 %v170, %v169
  %v189 = vpack.c.b16 %v172, %v171
  %v190 = vpack.c.b16 %v174, %v173
  %v191 = vpack.c.b16 %v176, %v175
  %v192 = vpack.c.b16 %v178, %v177
  %v193 = vpack.c.b16 %v180, %v179
  %v194 = vpack.c.b16 %v182, %v181
  %v195 = vpack.c.b16 %v183, %v183
  %vm207 = vcmask 424960
  %v209 = vsel %vm207, %v115, 0
  %v212 = vsel %vm207, %v117, 0
  %v215 = vsel %vm207, %v119, 0
  %v218 = vsel %vm207, %v121, 0
  %v221 = vsel %vm207, %v123, 0
  %v224 = vsel %vm207, %v125, 0
  %v227 = vsel %vm207, %v127, 0
  %v230 = vsel %vm207, %v129, 0
  %vm232 = vcmask 1041408
  %v234 = vsel %vm232, %v195, 0
  %236 = vmatpush.bf16.msra.mxu0 %v191
  %237 = vmatpush.bf16.msra.mxu0 %v190
  %238 = vmatpush.bf16.msra.mxu0 %v189
  %239 = vmatpush.bf16.msra.mxu0 %v188
  %240 = vmatpush.bf16.msra.mxu0 %v187
  %241 = vmatpush.bf16.msra.mxu0 %v186
  %242 = vmatpush.bf16.msra.mxu0 %v185
  %243 = vmatpush.bf16.msra.mxu0 %v184
  %244 = vmatmul.bf16.gmra.mxu0 %v114
  %v245 = vpop.f32.mrf.mxu0
  %v246 = vadd.f32 %v65, %v245
  %v247 = vpop.f32.mrf.mxu0
  %v248 = vadd.f32 %v65, %v247
  %249 = vmatmul.bf16.gmra.mxu0 %v116
  %v250 = vpop.f32.mrf.mxu0
  %v251 = vadd.f32 %v65, %v250
  %v252 = vpop.f32.mrf.mxu0
  %v253 = vadd.f32 %v65, %v252
  %254 = vmatmul.bf16.gmra.mxu0 %v118
  %v255 = vpop.f32.mrf.mxu0
  %v256 = vadd.f32 %v65, %v255
  %v257 = vpop.f32.mrf.mxu0
  %v258 = vadd.f32 %v65, %v257
  %259 = vmatmul.bf16.gmra.mxu0 %v120
  %v260 = vpop.f32.mrf.mxu0
  %v261 = vadd.f32 %v65, %v260
  %v262 = vpop.f32.mrf.mxu0
  %v263 = vadd.f32 %v65, %v262
  %264 = vmatmul.bf16.gmra.mxu0 %v122
  %v265 = vpop.f32.mrf.mxu0
  %v266 = vadd.f32 %v65, %v265
  %v267 = vpop.f32.mrf.mxu0
  %v268 = vadd.f32 %v65, %v267
  %269 = vmatmul.bf16.gmra.mxu0 %v124
  %v270 = vpop.f32.mrf.mxu0
  %v271 = vadd.f32 %v65, %v270
  %v272 = vpop.f32.mrf.mxu0
  %v273 = vadd.f32 %v65, %v272
  %274 = vmatmul.bf16.gmra.mxu0 %v126
  %v275 = vpop.f32.mrf.mxu0
  %v276 = vadd.f32 %v65, %v275
  %v277 = vpop.f32.mrf.mxu0
  %v278 = vadd.f32 %v65, %v277
  %279 = vmatmul.bf16.gmra.mxu0 %v128
  %v280 = vpop.f32.mrf.mxu0
  %v281 = vadd.f32 %v65, %v280
  %v282 = vpop.f32.mrf.mxu0
  %v283 = vadd.f32 %v65, %v282
  %284 = vdwg.mxu0
  %285 = vmatpush.bf16.msra.mxu0 0
  %286 = vmatpush.bf16.msra.mxu0 0
  %287 = vmatpush.bf16.msra.mxu0 0
  %288 = vmatpush.bf16.msra.mxu0 0
  %289 = vmatpush.bf16.msra.mxu0 %v234
  %290 = vmatpush.bf16.msra.mxu0 %v194
  %291 = vmatpush.bf16.msra.mxu0 %v193
  %292 = vmatpush.bf16.msra.mxu0 %v192
  %293 = vmatmul.bf16.gmra.mxu0 %v209
  %v294 = vpop.f32.mrf.mxu0
  %v295 = vadd.f32 %v246, %v294
  %v296 = vpop.f32.mrf.mxu0
  %v297 = vadd.f32 %v248, %v296
  %298 = vmatmul.bf16.gmra.mxu0 %v212
  %v299 = vpop.f32.mrf.mxu0
  %v300 = vadd.f32 %v251, %v299
  %v301 = vpop.f32.mrf.mxu0
  %v302 = vadd.f32 %v253, %v301
  %303 = vmatmul.bf16.gmra.mxu0 %v215
  %v304 = vpop.f32.mrf.mxu0
  %v305 = vadd.f32 %v256, %v304
  %v306 = vpop.f32.mrf.mxu0
  %v307 = vadd.f32 %v258, %v306
  %308 = vmatmul.bf16.gmra.mxu0 %v218
  %v309 = vpop.f32.mrf.mxu0
  %v310 = vadd.f32 %v261, %v309
  %v311 = vpop.f32.mrf.mxu0
  %v312 = vadd.f32 %v263, %v311
  %313 = vmatmul.bf16.gmra.mxu0 %v221
  %v314 = vpop.f32.mrf.mxu0
  %v315 = vadd.f32 %v266, %v314
  %v316 = vpop.f32.mrf.mxu0
  %v317 = vadd.f32 %v268, %v316
  %318 = vmatmul.bf16.gmra.mxu0 %v224
  %v319 = vpop.f32.mrf.mxu0
  %v320 = vadd.f32 %v271, %v319
  %v321 = vpop.f32.mrf.mxu0
  %v322 = vadd.f32 %v273, %v321
  %323 = vmatmul.bf16.gmra.mxu0 %v227
  %v324 = vpop.f32.mrf.mxu0
  %v325 = vadd.f32 %v276, %v324
  %v326 = vpop.f32.mrf.mxu0
  %v327 = vadd.f32 %v278, %v326
  %328 = vmatmul.bf16.gmra.mxu0 %v230
  %v329 = vpop.f32.mrf.mxu0
  %v330 = vadd.f32 %v281, %v329
  %v331 = vpop.f32.mrf.mxu0
  %v332 = vadd.f32 %v283, %v331
  %333 = vdwg.mxu0
  %v334 = vpack.c.bf16 %v297, %v295
  %v335 = vpack.c.bf16 %v302, %v300
  %v336 = vpack.c.bf16 %v307, %v305
  %v337 = vpack.c.bf16 %v312, %v310
  %v338 = vpack.c.bf16 %v317, %v315
  %v339 = vpack.c.bf16 %v322, %v320
  %v340 = vpack.c.bf16 %v327, %v325
  %v341 = vpack.c.bf16 %v332, %v330
  %v342 = vunpack.c.l.bf16 %v334
  %v343 = vunpack.c.h.bf16 %v334
  %v344 = vunpack.c.l.bf16 %v335
  %v345 = vunpack.c.h.bf16 %v335
  %v346 = vunpack.c.l.bf16 %v336
  %v347 = vunpack.c.h.bf16 %v336
  %v348 = vunpack.c.l.bf16 %v337
  %v349 = vunpack.c.h.bf16 %v337
  %v350 = vunpack.c.l.bf16 %v338
  %v351 = vunpack.c.h.bf16 %v338
  %v352 = vunpack.c.l.bf16 %v339
  %v353 = vunpack.c.h.bf16 %v339
  %v354 = vunpack.c.l.bf16 %v340
  %v355 = vunpack.c.h.bf16 %v340
  %v356 = vunpack.c.l.bf16 %v341
  %v357 = vunpack.c.h.bf16 %v341
  %v358 = vtanh.pop %v342
  %v359 = vtanh.pop %v343
  %v360 = vtanh.pop %v344
  %v361 = vtanh.pop %v345
  %v362 = vtanh.pop %v346
  %v363 = vtanh.pop %v347
  %v364 = vtanh.pop %v348
  %v365 = vtanh.pop %v349
  %v366 = vtanh.pop %v350
  %v367 = vtanh.pop %v351
  %v368 = vtanh.pop %v352
  %v369 = vtanh.pop %v353
  %v370 = vtanh.pop %v354
  %v371 = vtanh.pop %v355
  %v372 = vtanh.pop %v356
  %v373 = vtanh.pop %v357
  %v374 = vpack.c.bf16 %v359, %v358
  %v375 = vpack.c.bf16 %v361, %v360
  %v376 = vpack.c.bf16 %v363, %v362
  %v377 = vpack.c.bf16 %v365, %v364
  %v378 = vpack.c.bf16 %v367, %v366
  %v379 = vpack.c.bf16 %v369, %v368
  %v380 = vpack.c.bf16 %v371, %v370
  %v381 = vpack.c.bf16 %v373, %v372
  %v382 = vld [vmem:[%s2] sm:$0xf]
  %v383 = vld [vmem:[%s2 + $0x4] sm:$0xf]
  %v384 = vld [vmem:[%s2 + $0x8] sm:$0xf]
  %v385 = vld [vmem:[%s2 + $0xc] sm:$0xf]
  %v386 = vld [vmem:[%s2 + $0x10] sm:$0xf]
  %v387 = vld [vmem:[%s2 + $0x14] sm:$0xf]
  %v388 = vld [vmem:[%s2 + $0x18] sm:$0xf]
  %v389 = vld [vmem:[%s2 + $0x1c] sm:$0xf]
  %v390 = vperm.slane %v25, 1
  %v399 = vunpack.c.l.b16 %v382
  %v400 = vunpack.c.l.b16 %v383
  %v401 = vunpack.c.l.b16 %v384
  %v402 = vunpack.c.l.b16 %v385
  %v403 = vunpack.c.l.b16 %v386
  %v404 = vunpack.c.l.b16 %v387
  %v405 = vunpack.c.l.b16 %v388
  %v406 = vunpack.c.l.b16 %v389
  %v407 = vpack.c.b16 %v400, %v399
  %v408 = vpack.c.b16 %v402, %v401
  %v409 = vpack.c.b16 %v404, %v403
  %v410 = vpack.c.b16 %v406, %v405
  %vm415 = vcmask 523264
  %v417 = vsel %vm415, %v374, 0
  %v420 = vsel %vm415, %v375, 0
  %v423 = vsel %vm415, %v376, 0
  %v426 = vsel %vm415, %v377, 0
  %v429 = vsel %vm415, %v378, 0
  %v432 = vsel %vm415, %v379, 0
  %v435 = vsel %vm415, %v380, 0
  %v438 = vsel %vm415, %v381, 0
  %440 = vmatpush.bf16.msra.mxu0 0
  %441 = vmatpush.bf16.msra.mxu0 0
  %442 = vmatpush.bf16.msra.mxu0 0
  %443 = vmatpush.bf16.msra.mxu0 0
  %444 = vmatpush.bf16.msra.mxu0 %v410
  %445 = vmatpush.bf16.msra.mxu0 %v409
  %446 = vmatpush.bf16.msra.mxu0 %v408
  %447 = vmatpush.bf16.msra.mxu0 %v407
  %448 = vmatmul.bf16.gmra.mxu0 %v417
  %v449 = vpop.f32.mrf.mxu0
  %v450 = vadd.f32 %v390, %v449
  %v451 = vpop.f32.mrf.mxu0
  %v452 = vadd.f32 %v390, %v451
  %453 = vmatmul.bf16.gmra.mxu0 %v420
  %v454 = vpop.f32.mrf.mxu0
  %v455 = vadd.f32 %v390, %v454
  %v456 = vpop.f32.mrf.mxu0
  %v457 = vadd.f32 %v390, %v456
  %458 = vmatmul.bf16.gmra.mxu0 %v423
  %v459 = vpop.f32.mrf.mxu0
  %v460 = vadd.f32 %v390, %v459
  %v461 = vpop.f32.mrf.mxu0
  %v462 = vadd.f32 %v390, %v461
  %463 = vmatmul.bf16.gmra.mxu0 %v426
  %v464 = vpop.f32.mrf.mxu0
  %v465 = vadd.f32 %v390, %v464
  %v466 = vpop.f32.mrf.mxu0
  %v467 = vadd.f32 %v390, %v466
  %468 = vmatmul.bf16.gmra.mxu0 %v429
  %v469 = vpop.f32.mrf.mxu0
  %v470 = vadd.f32 %v390, %v469
  %v471 = vpop.f32.mrf.mxu0
  %v472 = vadd.f32 %v390, %v471
  %473 = vmatmul.bf16.gmra.mxu0 %v432
  %v474 = vpop.f32.mrf.mxu0
  %v475 = vadd.f32 %v390, %v474
  %v476 = vpop.f32.mrf.mxu0
  %v477 = vadd.f32 %v390, %v476
  %478 = vmatmul.bf16.gmra.mxu0 %v435
  %v479 = vpop.f32.mrf.mxu0
  %v480 = vadd.f32 %v390, %v479
  %v481 = vpop.f32.mrf.mxu0
  %v482 = vadd.f32 %v390, %v481
  %483 = vmatmul.bf16.gmra.mxu0 %v438
  %v484 = vpop.f32.mrf.mxu0
  %v485 = vadd.f32 %v390, %v484
  %v486 = vpop.f32.mrf.mxu0
  %v487 = vadd.f32 %v390, %v486
  %488 = vdwg.mxu0
  %v489 = vpack.c.bf16 %v452, %v450
  %v490 = vpack.c.bf16 %v457, %v455
  %v491 = vpack.c.bf16 %v462, %v460
  %v492 = vpack.c.bf16 %v467, %v465
  %v493 = vpack.c.bf16 %v472, %v470
  %v494 = vpack.c.bf16 %v477, %v475
  %v495 = vpack.c.bf16 %v482, %v480
  %v496 = vpack.c.bf16 %v487, %v485
  %v497 = vunpack.c.l.bf16 %v489
  %v498 = vunpack.c.h.bf16 %v489
  %v499 = vunpack.c.l.bf16 %v490
  %v500 = vunpack.c.h.bf16 %v490
  %v501 = vunpack.c.l.bf16 %v491
  %v502 = vunpack.c.h.bf16 %v491
  %v503 = vunpack.c.l.bf16 %v492
  %v504 = vunpack.c.h.bf16 %v492
  %v505 = vunpack.c.l.bf16 %v493
  %v506 = vunpack.c.h.bf16 %v493
  %v507 = vunpack.c.l.bf16 %v494
  %v508 = vunpack.c.h.bf16 %v494
  %v509 = vunpack.c.l.bf16 %v495
  %v510 = vunpack.c.h.bf16 %v495
  %v511 = vunpack.c.l.bf16 %v496
  %v512 = vunpack.c.h.bf16 %v496
  %v513 = vtanh.pop %v497
  %v514 = vtanh.pop %v498
  %v515 = vtanh.pop %v499
  %v516 = vtanh.pop %v500
  %v517 = vtanh.pop %v501
  %v518 = vtanh.pop %v502
  %v519 = vtanh.pop %v503
  %v520 = vtanh.pop %v504
  %v521 = vtanh.pop %v505
  %v522 = vtanh.pop %v506
  %v523 = vtanh.pop %v507
  %v524 = vtanh.pop %v508
  %v525 = vtanh.pop %v509
  %v526 = vtanh.pop %v510
  %v527 = vtanh.pop %v511
  %v528 = vtanh.pop %v512
  %v529 = vpack.c.bf16 %v514, %v513
  %v530 = vpack.c.bf16 %v516, %v515
  %v531 = vpack.c.bf16 %v518, %v517
  %v532 = vpack.c.bf16 %v520, %v519
  %v533 = vpack.c.bf16 %v522, %v521
  %v534 = vpack.c.bf16 %v524, %v523
  %v535 = vpack.c.bf16 %v526, %v525
  %v536 = vpack.c.bf16 %v528, %v527
  %s537 = scalar_lea.vmem %s2, 32
  %v538 = vld [vmem:[%s537] sm:$0xf]
  %v539 = vld [vmem:[%s537 + $0x4] sm:$0xf]
  %v540 = vld [vmem:[%s537 + $0x8] sm:$0xf]
  %v541 = vld [vmem:[%s537 + $0xc] sm:$0xf]
  %v542 = vld [vmem:[%s537 + $0x10] sm:$0xf]
  %v543 = vld [vmem:[%s537 + $0x14] sm:$0xf]
  %v544 = vld [vmem:[%s537 + $0x18] sm:$0xf]
  %v545 = vld [vmem:[%s537 + $0x1c] sm:$0xf]
  %v546 = vperm.slane %v25, 2
  %v555 = vunpack.c.l.b16 %v538
  %v556 = vunpack.c.l.b16 %v539
  %v557 = vunpack.c.l.b16 %v540
  %v558 = vunpack.c.l.b16 %v541
  %v559 = vunpack.c.l.b16 %v542
  %v560 = vunpack.c.l.b16 %v543
  %v561 = vunpack.c.l.b16 %v544
  %v562 = vunpack.c.l.b16 %v545
  %v563 = vpack.c.b16 %v556, %v555
  %v564 = vpack.c.b16 %v558, %v557
  %v565 = vpack.c.b16 %v560, %v559
  %v566 = vpack.c.b16 %v562, %v561
  %v572 = vsel %vm415, %v529, 0
  %v575 = vsel %vm415, %v530, 0
  %v578 = vsel %vm415, %v531, 0
  %v581 = vsel %vm415, %v532, 0
  %v584 = vsel %vm415, %v533, 0
  %v587 = vsel %vm415, %v534, 0
  %v590 = vsel %vm415, %v535, 0
  %v593 = vsel %vm415, %v536, 0
  %595 = vmatpush.bf16.msra.mxu0 0
  %596 = vmatpush.bf16.msra.mxu0 0
  %597 = vmatpush.bf16.msra.mxu0 0
  %598 = vmatpush.bf16.msra.mxu0 0
  %599 = vmatpush.bf16.msra.mxu0 %v566
  %600 = vmatpush.bf16.msra.mxu0 %v565
  %601 = vmatpush.bf16.msra.mxu0 %v564
  %602 = vmatpush.bf16.msra.mxu0 %v563
  %603 = vmatmul.bf16.gmra.mxu0 %v572
  %v604 = vpop.f32.mrf.mxu0
  %v605 = vadd.f32 %v546, %v604
  %v606 = vpop.f32.mrf.mxu0
  %v607 = vadd.f32 %v546, %v606
  %608 = vmatmul.bf16.gmra.mxu0 %v575
  %v609 = vpop.f32.mrf.mxu0
  %v610 = vadd.f32 %v546, %v609
  %v611 = vpop.f32.mrf.mxu0
  %v612 = vadd.f32 %v546, %v611
  %613 = vmatmul.bf16.gmra.mxu0 %v578
  %v614 = vpop.f32.mrf.mxu0
  %v615 = vadd.f32 %v546, %v614
  %v616 = vpop.f32.mrf.mxu0
  %v617 = vadd.f32 %v546, %v616
  %618 = vmatmul.bf16.gmra.mxu0 %v581
  %v619 = vpop.f32.mrf.mxu0
  %v620 = vadd.f32 %v546, %v619
  %v621 = vpop.f32.mrf.mxu0
  %v622 = vadd.f32 %v546, %v621
  %623 = vmatmul.bf16.gmra.mxu0 %v584
  %v624 = vpop.f32.mrf.mxu0
  %v625 = vadd.f32 %v546, %v624
  %v626 = vpop.f32.mrf.mxu0
  %v627 = vadd.f32 %v546, %v626
  %628 = vmatmul.bf16.gmra.mxu0 %v587
  %v629 = vpop.f32.mrf.mxu0
  %v630 = vadd.f32 %v546, %v629
  %v631 = vpop.f32.mrf.mxu0
  %v632 = vadd.f32 %v546, %v631
  %633 = vmatmul.bf16.gmra.mxu0 %v590
  %v634 = vpop.f32.mrf.mxu0
  %v635 = vadd.f32 %v546, %v634
  %v636 = vpop.f32.mrf.mxu0
  %v637 = vadd.f32 %v546, %v636
  %638 = vmatmul.bf16.gmra.mxu0 %v593
  %v639 = vpop.f32.mrf.mxu0
  %v640 = vadd.f32 %v546, %v639
  %v641 = vpop.f32.mrf.mxu0
  %v642 = vadd.f32 %v546, %v641
  %643 = vdwg.mxu0
  %v644 = vpack.c.bf16 %v607, %v605
  %v645 = vpack.c.bf16 %v612, %v610
  %v646 = vpack.c.bf16 %v617, %v615
  %v647 = vpack.c.bf16 %v622, %v620
  %v648 = vpack.c.bf16 %v627, %v625
  %v649 = vpack.c.bf16 %v632, %v630
  %v650 = vpack.c.bf16 %v637, %v635
  %v651 = vpack.c.bf16 %v642, %v640
  %v652 = vunpack.c.l.bf16 %v644
  %v653 = vunpack.c.h.bf16 %v644
  %v654 = vunpack.c.l.bf16 %v645
  %v655 = vunpack.c.h.bf16 %v645
  %v656 = vunpack.c.l.bf16 %v646
  %v657 = vunpack.c.h.bf16 %v646
  %v658 = vunpack.c.l.bf16 %v647
  %v659 = vunpack.c.h.bf16 %v647
  %v660 = vunpack.c.l.bf16 %v648
  %v661 = vunpack.c.h.bf16 %v648
  %v662 = vunpack.c.l.bf16 %v649
  %v663 = vunpack.c.h.bf16 %v649
  %v664 = vunpack.c.l.bf16 %v650
  %v665 = vunpack.c.h.bf16 %v650
  %v666 = vunpack.c.l.bf16 %v651
  %v667 = vunpack.c.h.bf16 %v651
  %v668 = vtanh.pop %v652
  %v669 = vtanh.pop %v653
  %v670 = vtanh.pop %v654
  %v671 = vtanh.pop %v655
  %v672 = vtanh.pop %v656
  %v673 = vtanh.pop %v657
  %v674 = vtanh.pop %v658
  %v675 = vtanh.pop %v659
  %v676 = vtanh.pop %v660
  %v677 = vtanh.pop %v661
  %v678 = vtanh.pop %v662
  %v679 = vtanh.pop %v663
  %v680 = vtanh.pop %v664
  %v681 = vtanh.pop %v665
  %v682 = vtanh.pop %v666
  %v683 = vtanh.pop %v667
  %v684 = vpack.c.bf16 %v669, %v668
  %v685 = vpack.c.bf16 %v671, %v670
  %v686 = vpack.c.bf16 %v673, %v672
  %v687 = vpack.c.bf16 %v675, %v674
  %v688 = vpack.c.bf16 %v677, %v676
  %v689 = vpack.c.bf16 %v679, %v678
  %v690 = vpack.c.bf16 %v681, %v680
  %v691 = vpack.c.bf16 %v683, %v682
  %v692 = vld [vmem:[%s3] sm:$0xf]
  %v693 = vld [vmem:[%s3 + $0x4] sm:$0xf]
  %v694 = vld [vmem:[%s3 + $0x8] sm:$0xf]
  %v695 = vld [vmem:[%s3 + $0xc] sm:$0xf]
  %v696 = vld [vmem:[%s3 + $0x10] sm:$0xf]
  %v697 = vld [vmem:[%s3 + $0x14] sm:$0xf]
  %v698 = vld [vmem:[%s3 + $0x18] sm:$0xf]
  %v699 = vld [vmem:[%s3 + $0x1c] sm:$0xf]
  %v700 = vld [vmem:[%s5] sm:$0x1]
  %v701 = vunpack.c.l.bf16 %v700
  %v702 = vperm.slane %v701, 0
  %v711 = vunpack.c.l.b16 %v692
  %v712 = vunpack.c.l.b16 %v693
  %v713 = vunpack.c.l.b16 %v694
  %v714 = vunpack.c.l.b16 %v695
  %v715 = vunpack.c.l.b16 %v696
  %v716 = vunpack.c.l.b16 %v697
  %v717 = vunpack.c.l.b16 %v698
  %v718 = vunpack.c.l.b16 %v699
  %v719 = vpack.c.b16 %v712, %v711
  %v720 = vpack.c.b16 %v714, %v713
  %v721 = vpack.c.b16 %v716, %v715
  %v722 = vpack.c.b16 %v718, %v717
  %v728 = vsel %vm415, %v684, 0
  %v731 = vsel %vm415, %v685, 0
  %v734 = vsel %vm415, %v686, 0
  %v737 = vsel %vm415, %v687, 0
  %v740 = vsel %vm415, %v688, 0
  %v743 = vsel %vm415, %v689, 0
  %v746 = vsel %vm415, %v690, 0
  %v749 = vsel %vm415, %v691, 0
  %751 = vmatpush.bf16.msra.mxu0 0
  %752 = vmatpush.bf16.msra.mxu0 0
  %753 = vmatpush.bf16.msra.mxu0 0
  %754 = vmatpush.bf16.msra.mxu0 0
  %755 = vmatpush.bf16.msra.mxu0 %v722
  %756 = vmatpush.bf16.msra.mxu0 %v721
  %757 = vmatpush.bf16.msra.mxu0 %v720
  %758 = vmatpush.bf16.msra.mxu0 %v719
  %759 = vmatmul.bf16.gmra.mxu0 %v728
  %v760 = vpop.f32.mrf.mxu0
  %v761 = vadd.f32 %v702, %v760
  %v762 = vpop.f32.mrf.mxu0
  %v763 = vadd.f32 %v702, %v762
  %764 = vmatmul.bf16.gmra.mxu0 %v731
  %v765 = vpop.f32.mrf.mxu0
  %v766 = vadd.f32 %v702, %v765
  %v767 = vpop.f32.mrf.mxu0
  %v768 = vadd.f32 %v702, %v767
  %769 = vmatmul.bf16.gmra.mxu0 %v734
  %v770 = vpop.f32.mrf.mxu0
  %v771 = vadd.f32 %v702, %v770
  %v772 = vpop.f32.mrf.mxu0
  %v773 = vadd.f32 %v702, %v772
  %774 = vmatmul.bf16.gmra.mxu0 %v737
  %v775 = vpop.f32.mrf.mxu0
  %v776 = vadd.f32 %v702, %v775
  %v777 = vpop.f32.mrf.mxu0
  %v778 = vadd.f32 %v702, %v777
  %779 = vmatmul.bf16.gmra.mxu0 %v740
  %v780 = vpop.f32.mrf.mxu0
  %v781 = vadd.f32 %v702, %v780
  %v782 = vpop.f32.mrf.mxu0
  %v783 = vadd.f32 %v702, %v782
  %784 = vmatmul.bf16.gmra.mxu0 %v743
  %v785 = vpop.f32.mrf.mxu0
  %v786 = vadd.f32 %v702, %v785
  %v787 = vpop.f32.mrf.mxu0
  %v788 = vadd.f32 %v702, %v787
  %789 = vmatmul.bf16.gmra.mxu0 %v746
  %v790 = vpop.f32.mrf.mxu0
  %v791 = vadd.f32 %v702, %v790
  %v792 = vpop.f32.mrf.mxu0
  %v793 = vadd.f32 %v702, %v792
  %794 = vmatmul.bf16.gmra.mxu0 %v749
  %v795 = vpop.f32.mrf.mxu0
  %v796 = vadd.f32 %v702, %v795
  %v797 = vpop.f32.mrf.mxu0
  %v798 = vadd.f32 %v702, %v797
  %799 = vdwg.mxu0
  %800 = vst [vmem:[%s6] sm:$0xff] %v761
  %801 = vst [vmem:[%s6 + $0x8] sm:$0xff] %v763
  %802 = vst [vmem:[%s6 + $0x10] sm:$0xff] %v766
  %803 = vst [vmem:[%s6 + $0x18] sm:$0xff] %v768
  %804 = vst [vmem:[%s6 + $0x20] sm:$0xff] %v771
  %805 = vst [vmem:[%s6 + $0x28] sm:$0xff] %v773
  %806 = vst [vmem:[%s6 + $0x30] sm:$0xff] %v776
  %807 = vst [vmem:[%s6 + $0x38] sm:$0xff] %v778
  %808 = vst [vmem:[%s6 + $0x40] sm:$0xff] %v781
  %809 = vst [vmem:[%s6 + $0x48] sm:$0xff] %v783
  %810 = vst [vmem:[%s6 + $0x50] sm:$0xff] %v786
  %811 = vst [vmem:[%s6 + $0x58] sm:$0xff] %v788
  %812 = vst [vmem:[%s6 + $0x60] sm:$0xff] %v791
  %813 = vst [vmem:[%s6 + $0x68] sm:$0xff] %v793
  %814 = vst [vmem:[%s6 + $0x70] sm:$0xff] %v796
  %815 = vst [vmem:[%s6 + $0x78] sm:$0xff] %v798
  // Predicated region
  $region26: #{pinn_forward.1} parent=0 // pred_check
    _
  $region27: #{pinn_forward.1} parent=0 // pred_check_branch
    %817 = sbr.rel (0) target = $region29
  $region28: #{pinn_forward.1} parent=0 // pred_region
    _
  $region29: #{pinn_forward.1} parent=0 // pred_fallthru
    _
  // Predicated region
  $region30: #{pinn_forward.1} parent=0 // pred_check
    _
  $region31: #{pinn_forward.1} parent=0 // pred_check_branch
    %819 = sbr.rel (0) target = $region33
  $region32: #{pinn_forward.1} parent=0 // pred_region
    _
  $region33: #{pinn_forward.1} parent=0 // pred_fallthru
    _

</llo_original>
